<compile_context>
chip_gen: v5e
topology: v5e:2x2
jax: 0.10.0
libtpu: 0.0.40
codegen_flags: <defaults>
</compile_context>

<pallas_src>
import jax
import jax.numpy as jnp
from jax.experimental import pallas as pl
from jax.experimental.pallas import tpu as pltpu


def modulate_kernel(shift_ref, scale_ref, z_ref, out_ref):
    # shift/scale: (bb, cb, 1, 1) f32; z/out: (bb, cb, hb, W).
    # Pure VPU affine; the (1,1) minor dims splat over the spatial tile, and the
    # store is a full-width lane-dense vst on the native layout.
    out_ref[...] = (shift_ref[...] + scale_ref[...] * z_ref[...]).astype(out_ref.dtype)


def _vmem_plan():
    """Pick (vmem_limit_bytes, per-block byte target) from the chip's VMEM size."""
    try:
        cap = int(pltpu.get_tpu_info().vmem_capacity_bytes)
    except Exception:
        cap = 64 * 1024 * 1024  # v7x-safe fallback
    limit = max(32 * 1024 * 1024, min(cap - 16 * 1024 * 1024, 96 * 1024 * 1024))
    # z + out are double-buffered -> ~4 live block-sized buffers (+ tiny shift/scale).
    target = max(2 * 1024 * 1024, limit // 6)
    return int(limit), int(target)


def _choose_block(B, C, H, W, itemsize, target_bytes):
    """Block (bb, cb, hb, W) with hb a multiple of 8 (or == H); W kept full."""
    w_pad = pl.cdiv(W, 128) * 128            # lanes physically moved per row
    h_pad = pl.cdiv(H, 8) * 8
    plane = h_pad * w_pad * itemsize          # one (b, c) spatial plane in VMEM
    if plane > target_bytes:
        hb = (target_bytes // (w_pad * itemsize)) // 8 * 8
        hb = int(max(8, hb))
        if hb >= H:
            hb = H
        return 1, 1, hb
    cb = int(min(C, max(1, target_bytes // plane)))
    if cb < C:
        return 1, cb, H
    bb = int(min(B, max(1, target_bytes // (plane * C))))
    return bb, C, H


@jax.jit
def deterministic_decoder(z, labels, w1, b1, w2, b2):
    """z: (B, C, H, W); labels: (B, cond_dim).

    Weights are (in, out): w1 (cond_dim, mid), w2 (mid, 2*C).  Callers holding
    PyTorch nn.Linear weights ((out, in)) must pass the transpose.
    """
    B, C, H, W = z.shape

    # --- tiny shift/scale MLP: plain fused jnp (a dedicated pallas_call launch
    #     would cost more than the math at these sizes).  nn.GELU() default is
    #     the exact (erf) GELU. ---
    f32 = jnp.float32
    h = jax.nn.gelu(labels.astype(f32) @ w1.astype(f32) + b1.astype(f32),
                    approximate=False)
    ss = (h @ w2.astype(f32) + b2.astype(f32)).reshape(B, C, 2)
    shift = ss[..., 0].reshape(B, C, 1, 1)   # per-(b, c) shift
    scale = ss[..., 1].reshape(B, C, 1, 1)   # per-(b, c) scale

    # --- bandwidth-bound modulation kernel on the native 4D layout ---
    vmem_limit, target_bytes = _vmem_plan()
    itemsize = jnp.dtype(z.dtype).itemsize
    bb, cb, hb = _choose_block(B, C, H, W, itemsize, target_bytes)
    grid = (pl.cdiv(B, bb), pl.cdiv(C, cb), pl.cdiv(H, hb))

    z_spec = pl.BlockSpec((bb, cb, hb, W), lambda i, j, k: (i, j, k, 0))
    # shift/scale block index is constant over the (innermost) H axis, so the
    # tiny (bb, cb, 1, 1) block is only re-fetched when the (b, c) block changes.
    ss_spec = pl.BlockSpec((bb, cb, 1, 1), lambda i, j, k: (i, j, 0, 0))

    return pl.pallas_call(
        modulate_kernel,
        out_shape=jax.ShapeDtypeStruct((B, C, H, W), z.dtype),
        grid_spec=pltpu.PrefetchScalarGridSpec(
            num_scalar_prefetch=0,
            grid=grid,
            in_specs=[ss_spec, ss_spec, z_spec],
            out_specs=z_spec,
        ),
        compiler_params=pltpu.CompilerParams(
            dimension_semantics=("parallel", "parallel", "parallel"),
            vmem_limit_bytes=vmem_limit,
        ),
    )(shift, scale, z)


def reference(z, labels, w1, b1, w2, b2):
    B, C, H, W = z.shape
    h = jax.nn.gelu(labels @ w1 + b1, approximate=False)
    ss = (h @ w2 + b2).reshape(B, C, 2)
    shift = ss[..., 0][:, :, None, None]
    scale = ss[..., 1][:, :, None, None]
    return shift + scale * z


if __name__ == "__main__":
    # Small shapes consistent with the module's forward.
    B, C, H, W = 2, 4, 16, 16
    conditional_dim, mid_dim = 8, 5

    key = jax.random.PRNGKey(0)
    kz, kl, kw1, kb1, kw2, kb2 = jax.random.split(key, 6)

    z = jax.random.normal(kz, (B, C, H, W), dtype=jnp.float32)
    labels = jax.random.normal(kl, (B, conditional_dim), dtype=jnp.float32)

    # Deterministic params (shapes from the nn.Linear layers; stored as (in, out)).
    w1 = jax.random.normal(kw1, (conditional_dim, mid_dim), dtype=jnp.float32) * 0.2
    b1 = jax.random.normal(kb1, (mid_dim,), dtype=jnp.float32) * 0.1
    w2 = jax.random.normal(kw2, (mid_dim, 2 * C), dtype=jnp.float32) * 0.2
    b2 = jax.random.normal(kb2, (2 * C,), dtype=jnp.float32) * 0.1

    out = deterministic_decoder(z, labels, w1, b1, w2, b2)
    out = jax.block_until_ready(out)

    ref = reference(z, labels, w1, b1, w2, b2)
    assert out.shape == (B, C, H, W)
    assert jnp.allclose(out, ref, atol=1e-5, rtol=1e-5), "mismatch vs reference"

    print("KERNEL_OK")
</pallas_src>

<mosaic_0001>
module attributes {stable_mosaic.version = 11 : i64} {
  func.func @modulate_kernel(%arg0: i32, %arg1: i32, %arg2: i32, %arg3: memref<2x4x1x1xf32, #tpu.memory_space<vmem>>, %arg4: memref<2x4x1x1xf32, #tpu.memory_space<vmem>>, %arg5: memref<2x4x16x16xf32, #tpu.memory_space<vmem>>, %arg6: memref<2x4x16x16xf32, #tpu.memory_space<vmem>>) attributes {dimension_semantics = [#tpu.dimension_semantics<parallel>, #tpu.dimension_semantics<parallel>, #tpu.dimension_semantics<parallel>], iteration_bounds = array<i64: 1, 1, 1>, scalar_prefetch = 0 : i64, scratch_operands = 0 : i64, tpu.core_type = #tpu.core_type<tc>, window_params = [{transform_indices = @transform_0, window_bounds = array<i64: 2, 4, 1, 1>}, {transform_indices = @transform_1, window_bounds = array<i64: 2, 4, 1, 1>}, {transform_indices = @transform_2, window_bounds = array<i64: 2, 4, 16, 16>}, {transform_indices = @transform_3, window_bounds = array<i64: 2, 4, 16, 16>}]} {
    %c0 = arith.constant 0 : index
    %c0_0 = arith.constant 0 : index
    %c0_1 = arith.constant 0 : index
    %c0_2 = arith.constant 0 : index
    %0 = vector.load %arg3[%c0, %c0_0, %c0_1, %c0_2] : memref<2x4x1x1xf32, #tpu.memory_space<vmem>>, vector<2x4x1x1xf32>
    %c0_3 = arith.constant 0 : index
    %c0_4 = arith.constant 0 : index
    %c0_5 = arith.constant 0 : index
    %c0_6 = arith.constant 0 : index
    %1 = vector.load %arg4[%c0_3, %c0_4, %c0_5, %c0_6] : memref<2x4x1x1xf32, #tpu.memory_space<vmem>>, vector<2x4x1x1xf32>
    %c0_7 = arith.constant 0 : index
    %c0_8 = arith.constant 0 : index
    %c0_9 = arith.constant 0 : index
    %c0_10 = arith.constant 0 : index
    %2 = vector.load %arg5[%c0_7, %c0_8, %c0_9, %c0_10] : memref<2x4x16x16xf32, #tpu.memory_space<vmem>>, vector<2x4x16x16xf32>
    %3 = vector.broadcast %1 : vector<2x4x1x1xf32> to vector<2x4x16x16xf32>
    %4 = arith.mulf %3, %2 : vector<2x4x16x16xf32>
    %5 = vector.broadcast %0 : vector<2x4x1x1xf32> to vector<2x4x16x16xf32>
    %6 = arith.addf %5, %4 : vector<2x4x16x16xf32>
    %c0_11 = arith.constant 0 : index
    %c0_12 = arith.constant 0 : index
    %c0_13 = arith.constant 0 : index
    %c0_14 = arith.constant 0 : index
    %7 = vector.load %arg6[%c0_11, %c0_12, %c0_13, %c0_14] : memref<2x4x16x16xf32, #tpu.memory_space<vmem>>, vector<2x4x16x16xf32>
    tpu.vector_store %arg6[%c0_11, %c0_12, %c0_13, %c0_14], %6 {strides = array<i32>} : memref<2x4x16x16xf32, #tpu.memory_space<vmem>>, vector<2x4x16x16xf32>,
    return
  }
  func.func @transform_0(%arg0: i32, %arg1: i32, %arg2: i32) -> (i32, i32, i32, i32) {
    %c0_i32 = arith.constant 0 : i32
    %c0_i32_0 = arith.constant 0 : i32
    %c0_i32_1 = arith.constant 0 : i32
    return %arg0, %arg1, %c0_i32, %c0_i32_0 : i32, i32, i32, i32
  }
  func.func @transform_1(%arg0: i32, %arg1: i32, %arg2: i32) -> (i32, i32, i32, i32) {
    %c0_i32 = arith.constant 0 : i32
    %c0_i32_0 = arith.constant 0 : i32
    %c0_i32_1 = arith.constant 0 : i32
    return %arg0, %arg1, %c0_i32, %c0_i32_0 : i32, i32, i32, i32
  }
  func.func @transform_2(%arg0: i32, %arg1: i32, %arg2: i32) -> (i32, i32, i32, i32) {
    %c0_i32 = arith.constant 0 : i32
    %c0_i32_0 = arith.constant 0 : i32
    return %arg0, %arg1, %arg2, %c0_i32 : i32, i32, i32, i32
  }
  func.func @transform_3(%arg0: i32, %arg1: i32, %arg2: i32) -> (i32, i32, i32, i32) {
    %c0_i32 = arith.constant 0 : i32
    %c0_i32_0 = arith.constant 0 : i32
    return %arg0, %arg1, %arg2, %c0_i32 : i32, i32, i32, i32
  }
}

</mosaic_0001>

<llo_original>
// kernel: deterministic_decoder.1
$region0: #{deterministic_decoder.1}
  #allocation0 [shape = 'u32[]', space=smem, size = 0x4, offset = 0x4, fixed_abs, tag = 'smem constant byte address 0x4 - core index']
  #allocation1 [shape = 'u32[72,128]{1,0:T(1,128)}', space=vmem, size = 0x9000, scoped, tag = 'internal scratch']
  %s0 = inlined_call_operand.vmem [shape: f32[2,4,1,1], index: 0, kind: input, shape index: {}]
  %s1 = inlined_call_operand.vmem [shape: f32[2,4,1,1], index: 1, kind: input, shape index: {}]
  %s2 = inlined_call_operand.hbm [shape: f32[2,4,16,16], index: 2, kind: input, shape index: {}]
  %s3 = inlined_call_operand.hbm [shape: f32[2,4,16,16], index: 3, kind: output, shape index: {}]
  %s4 = sld [smem:[#allocation0]]
  $region26: #{deterministic_decoder.1} parent=0
    _
  %s6 = ssub.s32 1, %s4
  %s7 = scalar_select 0, %s6, %s4
  $region1: #{deterministic_decoder.1} parent=0
    #allocation2 [shape = 'u8[65536]{0}', space=vmem, size = 0x10000, scoped, tag = 'input window, operand 2, single buffered']
    #allocation3 [shape = 's32[1]{0}', space=sflag, size = 0x4, scoped, tag = 'scoped memory for deterministic_decoder.1']
    #allocation4 [shape = 's32[1]{0}', space=sflag, size = 0x4, scoped, tag = 'scoped memory for deterministic_decoder.1']
    #allocation5 [shape = 'u8[65536]{0}', space=vmem, size = 0x10000, scoped, tag = 'output window, operand 0, single buffered']
    %8 = vsyncpa [#allocation3], 0
    %9 = vsyncpa [#allocation4], 0
    // Predicated region
    $region2: #{deterministic_decoder.1} parent=1 // pred_check
      _
    $region3: #{deterministic_decoder.1} parent=1 // pred_check_branch
      %11 = sbr.rel (0) target = $region5
    $region4: #{deterministic_decoder.1} parent=1 // pred_region
      _
    $region5: #{deterministic_decoder.1} parent=1 // pred_fallthru
      _
    // Predicated region
    $region6: #{deterministic_decoder.1} parent=1 // pred_check
      _
    $region7: #{deterministic_decoder.1} parent=1 // pred_check_branch
      %13 = sbr.rel (0) target = $region9
    $region8: #{deterministic_decoder.1} parent=1 // pred_region
      _
    $region9: #{deterministic_decoder.1} parent=1 // pred_fallthru
      _
    // Predicated region
    $region10: #{deterministic_decoder.1} parent=1 // pred_check
      _
    $region11: #{deterministic_decoder.1} parent=1 // pred_check_branch
      %15 = sbr.rel (0) target = $region13
    $region12: #{deterministic_decoder.1} parent=1 // pred_region
      %17 = vsyncadd [#allocation3], 0
      %s18 = sshll.u32 %s2, 4
      %s19 = int_to_ptr.hbm [resolvable:$true] %s18
      %s20 = sshll.u32 [#allocation2], 4
      %s21 = int_to_ptr.vmem [resolvable:$true] %s20
      %26 = dma.hbm_to_vmem [thread:$0]  %s19, 2048, %s21, [#allocation3], 128, 128, 8
    $region13: #{deterministic_decoder.1} parent=1 // pred_fallthru
      _
    // Predicated region
    $region14: #{deterministic_decoder.1} parent=1 // pred_check
      _
    $region15: #{deterministic_decoder.1} parent=1 // pred_check_branch
      %28 = sbr.rel (0) target = $region17
    $region16: #{deterministic_decoder.1} parent=1 // pred_region
      %30 = dma.done [#allocation3], 2048
    $region17: #{deterministic_decoder.1} parent=1 // pred_fallthru
      _
    %v31 = vld [vmem:[%s0] sm:$0x1]
    %v32 = vld [vmem:[%s0 + $0x1] sm:$0x1]
    %v33 = vld [vmem:[%s0 + $0x2] sm:$0x1]
    %v34 = vld [vmem:[%s0 + $0x3] sm:$0x1]
    %v35 = vld [vmem:[%s0 + $0x4] sm:$0x1]
    %v36 = vld [vmem:[%s0 + $0x5] sm:$0x1]
    %v37 = vld [vmem:[%s0 + $0x6] sm:$0x1]
    %v38 = vld [vmem:[%s0 + $0x7] sm:$0x1]
    %v39 = vld [vmem:[%s1] sm:$0x1]
    %v40 = vld [vmem:[%s1 + $0x1] sm:$0x1]
    %v41 = vld [vmem:[%s1 + $0x2] sm:$0x1]
    %v42 = vld [vmem:[%s1 + $0x3] sm:$0x1]
    %v43 = vld [vmem:[%s1 + $0x4] sm:$0x1]
    %v44 = vld [vmem:[%s1 + $0x5] sm:$0x1]
    %v45 = vld [vmem:[%s1 + $0x6] sm:$0x1]
    %v46 = vld [vmem:[%s1 + $0x7] sm:$0x1]
    %v47 = vld [vmem:[#allocation2] sm:$0xff]
    %v48 = vld [vmem:[#allocation2 + $0x8] sm:$0xff]
    %v49 = vld [vmem:[#allocation2 + $0x10] sm:$0xff]
    %v50 = vld [vmem:[#allocation2 + $0x18] sm:$0xff]
    %v51 = vld [vmem:[#allocation2 + $0x20] sm:$0xff]
    %v52 = vld [vmem:[#allocation2 + $0x28] sm:$0xff]
    %v53 = vld [vmem:[#allocation2 + $0x30] sm:$0xff]
    %v54 = vld [vmem:[#allocation2 + $0x38] sm:$0xff]
    %v55 = vld [vmem:[#allocation2 + $0x40] sm:$0xff]
    %v56 = vld [vmem:[#allocation2 + $0x48] sm:$0xff]
    %v57 = vld [vmem:[#allocation2 + $0x50] sm:$0xff]
    %v58 = vld [vmem:[#allocation2 + $0x58] sm:$0xff]
    %v59 = vld [vmem:[#allocation2 + $0x60] sm:$0xff]
    %v60 = vld [vmem:[#allocation2 + $0x68] sm:$0xff]
    %v61 = vld [vmem:[#allocation2 + $0x70] sm:$0xff]
    %v62 = vld [vmem:[#allocation2 + $0x78] sm:$0xff]
    %v71 = vperm.slane %v39, 0
    %v72 = vperm.slane %v40, 0
    %v73 = vperm.slane %v41, 0
    %v74 = vperm.slane %v42, 0
    %v75 = vperm.slane %v43, 0
    %v76 = vperm.slane %v44, 0
    %v77 = vperm.slane %v45, 0
    %v78 = vperm.slane %v46, 0
    %79 = vset.pattern.permute.xlu0 0
    %80 = vperm.xlu0 %79, %v71
    %v81 = vpop.permute.xlu0 %80
    %83 = vset.pattern.permute.xlu0 0
    %84 = vperm.xlu0 %83, %v72
    %v85 = vpop.permute.xlu0 %84
    %87 = vset.pattern.permute.xlu0 0
    %88 = vperm.xlu0 %87, %v73
    %v89 = vpop.permute.xlu0 %88
    %91 = vset.pattern.permute.xlu0 0
    %92 = vperm.xlu0 %91, %v74
    %v93 = vpop.permute.xlu0 %92
    %95 = vset.pattern.permute.xlu0 0
    %96 = vperm.xlu0 %95, %v75
    %v97 = vpop.permute.xlu0 %96
    %99 = vset.pattern.permute.xlu0 0
    %100 = vperm.xlu0 %99, %v76
    %v101 = vpop.permute.xlu0 %100
    %103 = vset.pattern.permute.xlu0 0
    %104 = vperm.xlu0 %103, %v77
    %v105 = vpop.permute.xlu0 %104
    %107 = vset.pattern.permute.xlu0 0
    %108 = vperm.xlu0 %107, %v78
    %v109 = vpop.permute.xlu0 %108
    %v111 = vmul.f32 %v81, %v47
    %v112 = vmul.f32 %v81, %v48
    %v113 = vmul.f32 %v85, %v49
    %v114 = vmul.f32 %v85, %v50
    %v115 = vmul.f32 %v89, %v51
    %v116 = vmul.f32 %v89, %v52
    %v117 = vmul.f32 %v93, %v53
    %v118 = vmul.f32 %v93, %v54
    %v119 = vmul.f32 %v97, %v55
    %v120 = vmul.f32 %v97, %v56
    %v121 = vmul.f32 %v101, %v57
    %v122 = vmul.f32 %v101, %v58
    %v123 = vmul.f32 %v105, %v59
    %v124 = vmul.f32 %v105, %v60
    %v125 = vmul.f32 %v109, %v61
    %v126 = vmul.f32 %v109, %v62
    %v135 = vperm.slane %v31, 0
    %v136 = vperm.slane %v32, 0
    %v137 = vperm.slane %v33, 0
    %v138 = vperm.slane %v34, 0
    %v139 = vperm.slane %v35, 0
    %v140 = vperm.slane %v36, 0
    %v141 = vperm.slane %v37, 0
    %v142 = vperm.slane %v38, 0
    %143 = vset.pattern.permute.xlu0 0
    %144 = vperm.xlu0 %143, %v135
    %v145 = vpop.permute.xlu0 %144
    %147 = vset.pattern.permute.xlu0 0
    %148 = vperm.xlu0 %147, %v136
    %v149 = vpop.permute.xlu0 %148
    %151 = vset.pattern.permute.xlu0 0
    %152 = vperm.xlu0 %151, %v137
    %v153 = vpop.permute.xlu0 %152
    %155 = vset.pattern.permute.xlu0 0
    %156 = vperm.xlu0 %155, %v138
    %v157 = vpop.permute.xlu0 %156
    %159 = vset.pattern.permute.xlu0 0
    %160 = vperm.xlu0 %159, %v139
    %v161 = vpop.permute.xlu0 %160
    %163 = vset.pattern.permute.xlu0 0
    %164 = vperm.xlu0 %163, %v140
    %v165 = vpop.permute.xlu0 %164
    %167 = vset.pattern.permute.xlu0 0
    %168 = vperm.xlu0 %167, %v141
    %v169 = vpop.permute.xlu0 %168
    %171 = vset.pattern.permute.xlu0 0
    %172 = vperm.xlu0 %171, %v142
    %v173 = vpop.permute.xlu0 %172
    %v175 = vadd.f32 %v145, %v111
    %v176 = vadd.f32 %v145, %v112
    %v177 = vadd.f32 %v149, %v113
    %v178 = vadd.f32 %v149, %v114
    %v179 = vadd.f32 %v153, %v115
    %v180 = vadd.f32 %v153, %v116
    %v181 = vadd.f32 %v157, %v117
    %v182 = vadd.f32 %v157, %v118
    %v183 = vadd.f32 %v161, %v119
    %v184 = vadd.f32 %v161, %v120
    %v185 = vadd.f32 %v165, %v121
    %v186 = vadd.f32 %v165, %v122
    %v187 = vadd.f32 %v169, %v123
    %v188 = vadd.f32 %v169, %v124
    %v189 = vadd.f32 %v173, %v125
    %v190 = vadd.f32 %v173, %v126
    %vm191 = vcmask 130048
    %192 = vst.msk [vmem:[#allocation5] sm:$0xff] %vm191, %v175
    %193 = vst.msk [vmem:[#allocation5 + $0x8] sm:$0xff] %vm191, %v176
    %194 = vst.msk [vmem:[#allocation5 + $0x10] sm:$0xff] %vm191, %v177
    %195 = vst.msk [vmem:[#allocation5 + $0x18] sm:$0xff] %vm191, %v178
    %196 = vst.msk [vmem:[#allocation5 + $0x20] sm:$0xff] %vm191, %v179
    %197 = vst.msk [vmem:[#allocation5 + $0x28] sm:$0xff] %vm191, %v180
    %198 = vst.msk [vmem:[#allocation5 + $0x30] sm:$0xff] %vm191, %v181
    %199 = vst.msk [vmem:[#allocation5 + $0x38] sm:$0xff] %vm191, %v182
    %200 = vst.msk [vmem:[#allocation5 + $0x40] sm:$0xff] %vm191, %v183
    %201 = vst.msk [vmem:[#allocation5 + $0x48] sm:$0xff] %vm191, %v184
    %202 = vst.msk [vmem:[#allocation5 + $0x50] sm:$0xff] %vm191, %v185
    %203 = vst.msk [vmem:[#allocation5 + $0x58] sm:$0xff] %vm191, %v186
    %204 = vst.msk [vmem:[#allocation5 + $0x60] sm:$0xff] %vm191, %v187
    %205 = vst.msk [vmem:[#allocation5 + $0x68] sm:$0xff] %vm191, %v188
    %206 = vst.msk [vmem:[#allocation5 + $0x70] sm:$0xff] %vm191, %v189
    %207 = vst.msk [vmem:[#allocation5 + $0x78] sm:$0xff] %vm191, %v190
    // Predicated region
    $region18: #{deterministic_decoder.1} parent=1 // pred_check
      _
    $region19: #{deterministic_decoder.1} parent=1 // pred_check_branch
      %209 = sbr.rel (0) target = $region21
    $region20: #{deterministic_decoder.1} parent=1 // pred_region
      %211 = vsyncadd [#allocation4], 0
      %s212 = sshll.u32 [#allocation5], 4
      %s213 = int_to_ptr.vmem [resolvable:$true] %s212
      %s214 = sshll.u32 %s3, 4
      %s215 = int_to_ptr.hbm [resolvable:$true] %s214
      %220 = dma.vmem_to_hbm [thread:$0]  %s213, 2048, %s215, [#allocation4], 128, 128, 8
    $region21: #{deterministic_decoder.1} parent=1 // pred_fallthru
      _
    // Predicated region
    $region22: #{deterministic_decoder.1} parent=1 // pred_check
      _
    $region23: #{deterministic_decoder.1} parent=1 // pred_check_branch
      %222 = sbr.rel (0) target = $region25
    $region24: #{deterministic_decoder.1} parent=1 // pred_region
      %224 = dma.done [#allocation4], 2048
    $region25: #{deterministic_decoder.1} parent=1 // pred_fallthru
      _
    %225 = vsyncpa [#allocation3], 1
    %226 = vsyncpa [#allocation4], 1

</llo_original>
